<compile_context>
chip_gen: v7x
topology: tpu7x:2x2x1
jax: 0.10.0
libtpu: 0.0.40
codegen_flags: <defaults>
</compile_context>

<pallas_src>
import functools

import jax
import jax.numpy as jnp
from jax.experimental import pallas as pl
from jax.experimental.pallas import tpu as pltpu


# ----------------------------------------------------------------------------
# In-kernel exact GELU (erf-based, matches PyTorch nn.GELU() default)
# ----------------------------------------------------------------------------
_SQRT_HALF = 0.7071067811865476


def _erf(x, approx_reciprocal):
    # Abramowitz & Stegun 7.1.26 rational approximation, |abs err| < 1.5e-7.
    # Uses only VPU/EUP-friendly ops (abs, mul, add, recip/div, exp, select).
    p = 0.3275911
    a1, a2, a3, a4, a5 = (0.254829592, -0.284496736, 1.421413741,
                          -1.453152027, 1.061405429)
    z = jnp.abs(x)
    denom = 1.0 + p * z
    if approx_reciprocal:
        t = pl.reciprocal(denom, approx=True)   # EUP slot -> effectively free
    else:
        t = 1.0 / denom
    poly = ((((a5 * t + a4) * t + a3) * t + a2) * t + a1) * t
    y = 1.0 - poly * jnp.exp(-z * z)
    return jnp.where(x < 0.0, -y, y)


def _gelu_exact(x, approx_reciprocal):
    return 0.5 * x * (1.0 + _erf(x * _SQRT_HALF, approx_reciprocal))


# ----------------------------------------------------------------------------
# Fused MLP-head kernel: (tm, K) -> linear -> GELU -> linear -> (tm, N)
# ----------------------------------------------------------------------------
def _mlp_head_kernel(x_ref, w1_ref, b1_ref, w2_ref, b2_ref, o_ref, *,
                     matmul_dtype, approx_reciprocal):
    n = o_ref.shape[-1]
    # In-kernel cast of the row tile to the MXU operand dtype (no extra HBM pass).
    x = x_ref[...].astype(matmul_dtype)
    # Linear 1 on the MXU; the hidden activation never leaves VMEM/vregs.
    h = jnp.dot(x, w1_ref[...], preferred_element_type=jnp.float32)
    h = h + b1_ref[...]
    # nn.Dropout(0.2) == identity at inference time.
    # TODO(synk): training-mode stochastic dropout (pltpu.prng_seed +
    # pltpu.stateful_bernoulli) intentionally not emitted; inference semantics only.
    h = _gelu_exact(h, approx_reciprocal)
    # Linear 2: compute at the 128-padded width (clean MXU/vreg layout), but store
    # only the real `n` logit columns -> output HBM traffic is n/128 of the padded
    # version and the post-call slice disappears.
    acc = jnp.dot(h.astype(matmul_dtype), w2_ref[...],
                  preferred_element_type=jnp.float32) + b2_ref[...]
    o_ref[...] = acc[:, :n].astype(o_ref.dtype)


# ----------------------------------------------------------------------------
# Host-side helpers
# ----------------------------------------------------------------------------
def _round_up(v, m):
    return (v + m - 1) // m * m


def _cdiv(a, b):
    return (a + b - 1) // b


def _choose_tm(batch, tm_max):
    # Rows per grid step: as large as possible (amortise the ~0.35us/step overhead and
    # the per-step x/out DMAs) but with >= 2 steps whenever the batch allows it, so the
    # "parallel" batch axis can shard across both v7x TensorCores.  Multiple of 8.
    if batch <= 8:
        return batch                      # one block equal to the full batch dim (legal)
    return max(8, min(_round_up(tm_max, 8), _round_up(_cdiv(batch, 2), 8)))


def _vmem_limit_bytes(tm, k, hp, np_, n, mm_bytes):
    # Shape-derived scoped-VMEM budget (+~50% headroom) instead of a hard-coded 32 MiB.
    x_tile = tm * k * 4                                   # x tile kept f32 in VMEM
    out_tile = tm * n * 4
    weights = (k * hp + hp * np_) * mm_bytes + (hp + np_) * 4
    need = 2 * (x_tile + out_tile) + 2 * weights          # double-buffered pipeline bufs
    need = int(need * 1.5) + (1 << 20)                    # headroom + compiler scratch
    return max(4 * 1024 * 1024, min(need, 100 * 1024 * 1024))


def _fused_head(x, w1p, b1p, w2p, b2p, *, num_classes, tm_max, matmul_dtype,
                approx_reciprocal):
    b, k = x.shape
    hp = w1p.shape[1]
    np_ = w2p.shape[1]
    n = num_classes
    tm = _choose_tm(b, tm_max)
    grid = (_cdiv(b, tm),)                                # ragged last tile is fine
    mm_bytes = jnp.dtype(matmul_dtype).itemsize
    kernel = functools.partial(_mlp_head_kernel, matmul_dtype=matmul_dtype,
                               approx_reciprocal=approx_reciprocal)

    return pl.pallas_call(
        kernel,
        out_shape=jax.ShapeDtypeStruct((b, n), jnp.float32),
        grid_spec=pltpu.PrefetchScalarGridSpec(
            num_scalar_prefetch=0,
            grid=grid,
            in_specs=[
                pl.BlockSpec((tm, k), lambda i: (i, 0)),    # x rows (pipelined)
                # Grid-invariant blocks (constant index map) stay resident in VMEM.
                # (pipeline_mode=pl.Buffered(1) would halve their VMEM footprint on
                #  v7x for large mid_dim; default buffering kept at these sizes.)
                pl.BlockSpec((k, hp), lambda i: (0, 0)),    # w1
                pl.BlockSpec((1, hp), lambda i: (0, 0)),    # b1
                pl.BlockSpec((hp, np_), lambda i: (0, 0)),  # w2
                pl.BlockSpec((1, np_), lambda i: (0, 0)),   # b2
            ],
            out_specs=pl.BlockSpec((tm, n), lambda i: (i, 0)),  # true-width logits
        ),
        compiler_params=pltpu.CompilerParams(
            dimension_semantics=("parallel",),
            vmem_limit_bytes=_vmem_limit_bytes(tm, k, hp, np_, n, mm_bytes),
        ),
    )(x.astype(jnp.float32), w1p, b1p, w2p, b2p)


# ----------------------------------------------------------------------------
# ClassifierHead_3: prepare weights once at init, return a jitted forward
# ----------------------------------------------------------------------------
def make_classifier_head_3(params, *, matmul_dtype=jnp.bfloat16, tm_max=1024,
                           approx_reciprocal=True):
    """Pad + cast the head weights once; return forward(x, mask) -> (B, num_classes)."""
    w1, b1, w2, b2 = params["w1"], params["b1"], params["w2"], params["b2"]
    k, h = w1.shape
    n = w2.shape[1]
    hp = _round_up(h, 128)      # lane-align the hidden width -> full vregs in-kernel
    np_ = _round_up(n, 128)     # lane-align the 2nd matmul width (compute-only padding)

    w1p = jnp.pad(w1.astype(jnp.float32), ((0, 0), (0, hp - h))).astype(matmul_dtype)
    b1p = jnp.pad(b1.reshape(1, -1).astype(jnp.float32), ((0, 0), (0, hp - h)))
    w2p = jnp.pad(w2.astype(jnp.float32),
                  ((0, hp - h), (0, np_ - n))).astype(matmul_dtype)
    b2p = jnp.pad(b2.reshape(1, -1).astype(jnp.float32), ((0, 0), (0, np_ - n)))

    @jax.jit
    def forward(x, mask=None):
        # The original module ignores `mask`.
        del mask
        return _fused_head(x, w1p, b1p, w2p, b2p, num_classes=n, tm_max=tm_max,
                           matmul_dtype=matmul_dtype,
                           approx_reciprocal=approx_reciprocal)

    return forward


if __name__ == "__main__":
    B, base_dim, mid_dim, num_classes = 16, 32, 64, 5

    key = jax.random.PRNGKey(0)
    kx, k1, k2, k3, k4 = jax.random.split(key, 5)
    x = jax.random.normal(kx, (B, base_dim), jnp.float32)
    mask = jnp.ones((B,), jnp.float32)          # unused by the module's forward
    params = {
        "w1": jax.random.normal(k1, (base_dim, mid_dim), jnp.float32) * 0.1,
        "b1": jax.random.normal(k2, (mid_dim,), jnp.float32) * 0.01,
        "w2": jax.random.normal(k3, (mid_dim, num_classes), jnp.float32) * 0.1,
        "b2": jax.random.normal(k4, (num_classes,), jnp.float32) * 0.01,
    }

    # Pure-JAX reference: Linear -> (Dropout=identity) -> exact GELU -> Linear.
    h_ref = jnp.dot(x, params["w1"], precision=jax.lax.Precision.HIGHEST) + params["b1"]
    h_ref = jax.nn.gelu(h_ref, approximate=False)
    out_ref = (jnp.dot(h_ref, params["w2"], precision=jax.lax.Precision.HIGHEST)
               + params["b2"])

    # 1) Default fast path: bf16 MXU operands + approx-reciprocal erf (v6e/v7x sweet
    #    spot).  Tolerance reflects bf16 operand rounding on the two matmuls.
    fwd_fast = make_classifier_head_3(params)
    out_fast = jax.block_until_ready(fwd_fast(x, mask))
    assert out_fast.shape == (B, num_classes), out_fast.shape
    err_fast = jnp.max(jnp.abs(out_fast - out_ref))
    assert jnp.allclose(out_fast, out_ref, atol=2e-2, rtol=2e-2), f"bf16 max err {err_fast}"

    # 2) High-precision fallback path: f32 MXU operands + exact erf divide, validated
    #    at the original tight tolerance.
    fwd_precise = make_classifier_head_3(params, matmul_dtype=jnp.float32,
                                         approx_reciprocal=False)
    out_precise = jax.block_until_ready(fwd_precise(x, mask))
    assert out_precise.shape == (B, num_classes), out_precise.shape
    err_precise = jnp.max(jnp.abs(out_precise - out_ref))
    assert jnp.allclose(out_precise, out_ref, atol=1e-3, rtol=1e-3), f"f32 max err {err_precise}"

    print("KERNEL_OK")
</pallas_src>

<mosaic_0001>
module attributes {stable_mosaic.version = 11 : i64} {
  func.func @_mlp_head_kernel(%arg0: i32, %arg1: memref<8x32xf32, #tpu.memory_space<vmem>>, %arg2: memref<32x128xbf16, #tpu.memory_space<vmem>>, %arg3: memref<1x128xf32, #tpu.memory_space<vmem>>, %arg4: memref<128x128xbf16, #tpu.memory_space<vmem>>, %arg5: memref<1x128xf32, #tpu.memory_space<vmem>>, %arg6: memref<8x5xf32, #tpu.memory_space<vmem>>) attributes {dimension_semantics = [#tpu.dimension_semantics<parallel>], iteration_bounds = array<i64: 2>, scalar_prefetch = 0 : i64, scratch_operands = 0 : i64, tpu.core_type = #tpu.core_type<tc>, window_params = [{transform_indices = @transform_0, window_bounds = array<i64: 8, 32>}, {pipeline_mode = #tpu.pipeline_mode<synchronous>, transform_indices = @transform_1, window_bounds = array<i64: 32, 128>}, {pipeline_mode = #tpu.pipeline_mode<synchronous>, transform_indices = @transform_2, window_bounds = array<i64: 1, 128>}, {pipeline_mode = #tpu.pipeline_mode<synchronous>, transform_indices = @transform_3, window_bounds = array<i64: 128, 128>}, {pipeline_mode = #tpu.pipeline_mode<synchronous>, transform_indices = @transform_4, window_bounds = array<i64: 1, 128>}, {transform_indices = @transform_5, window_bounds = array<i64: 8, 5>}]} {
    %c0 = arith.constant 0 : index
    %c0_0 = arith.constant 0 : index
    %0 = vector.load %arg1[%c0, %c0_0] : memref<8x32xf32, #tpu.memory_space<vmem>>, vector<8x32xf32>
    %1 = arith.truncf %0 : vector<8x32xf32> to vector<8x32xbf16>
    %c0_1 = arith.constant 0 : index
    %c0_2 = arith.constant 0 : index
    %2 = vector.load %arg2[%c0_1, %c0_2] : memref<32x128xbf16, #tpu.memory_space<vmem>>, vector<32x128xbf16>
    %cst = arith.constant dense<0.000000e+00> : vector<8x128xf32>
    %3 = tpu.matmul %1, %2, %cst {dimension_numbers = #tpu.dot_dimension_numbers<[1], [0], [0], [1], [0, 0, 1, 1], [], []>} : vector<8x32xbf16>, vector<32x128xbf16>, vector<8x128xf32> -> vector<8x128xf32>
    %c0_3 = arith.constant 0 : index
    %c0_4 = arith.constant 0 : index
    %4 = vector.load %arg3[%c0_3, %c0_4] : memref<1x128xf32, #tpu.memory_space<vmem>>, vector<1x128xf32>
    %5 = vector.broadcast %4 : vector<1x128xf32> to vector<8x128xf32>
    %6 = arith.addf %3, %5 : vector<8x128xf32>
    %cst_5 = arith.constant 5.000000e-01 : f32
    %7 = vector.broadcast %cst_5 : f32 to vector<8x128xf32>
    %8 = arith.mulf %7, %6 : vector<8x128xf32>
    %cst_6 = arith.constant 0.707106769 : f32
    %9 = vector.broadcast %cst_6 : f32 to vector<8x128xf32>
    %10 = arith.mulf %6, %9 : vector<8x128xf32>
    %11 = math.absf %10 : vector<8x128xf32>
    %cst_7 = arith.constant 0.327591091 : f32
    %12 = vector.broadcast %cst_7 : f32 to vector<8x128xf32>
    %13 = arith.mulf %12, %11 : vector<8x128xf32>
    %cst_8 = arith.constant 1.000000e+00 : f32
    %14 = vector.broadcast %cst_8 : f32 to vector<8x128xf32>
    %15 = arith.addf %14, %13 : vector<8x128xf32>
    %16 = tpu.reciprocal %15 {approx = true} : vector<8x128xf32> -> vector<8x128xf32>
    %cst_9 = arith.constant 1.06140542 : f32
    %17 = vector.broadcast %cst_9 : f32 to vector<8x128xf32>
    %18 = arith.mulf %17, %16 : vector<8x128xf32>
    %cst_10 = arith.constant -1.45315206 : f32
    %19 = vector.broadcast %cst_10 : f32 to vector<8x128xf32>
    %20 = arith.addf %18, %19 : vector<8x128xf32>
    %21 = arith.mulf %20, %16 : vector<8x128xf32>
    %cst_11 = arith.constant 1.42141378 : f32
    %22 = vector.broadcast %cst_11 : f32 to vector<8x128xf32>
    %23 = arith.addf %21, %22 : vector<8x128xf32>
    %24 = arith.mulf %23, %16 : vector<8x128xf32>
    %cst_12 = arith.constant -0.284496725 : f32
    %25 = vector.broadcast %cst_12 : f32 to vector<8x128xf32>
    %26 = arith.addf %24, %25 : vector<8x128xf32>
    %27 = arith.mulf %26, %16 : vector<8x128xf32>
    %cst_13 = arith.constant 0.254829586 : f32
    %28 = vector.broadcast %cst_13 : f32 to vector<8x128xf32>
    %29 = arith.addf %27, %28 : vector<8x128xf32>
    %30 = arith.mulf %29, %16 : vector<8x128xf32>
    %cst_14 = arith.constant 0.000000e+00 : f32
    %31 = vector.broadcast %cst_14 : f32 to vector<8x128xf32>
    %32 = arith.subf %31, %11 : vector<8x128xf32>
    %33 = arith.mulf %32, %11 : vector<8x128xf32>
    %34 = math.exp %33 : vector<8x128xf32>
    %35 = arith.mulf %30, %34 : vector<8x128xf32>
    %cst_15 = arith.constant 1.000000e+00 : f32
    %36 = vector.broadcast %cst_15 : f32 to vector<8x128xf32>
    %37 = arith.subf %36, %35 : vector<8x128xf32>
    %cst_16 = arith.constant 0.000000e+00 : f32
    %38 = vector.broadcast %cst_16 : f32 to vector<8x128xf32>
    %39 = arith.cmpf olt, %10, %38 : vector<8x128xf32>
    %cst_17 = arith.constant 0.000000e+00 : f32
    %40 = vector.broadcast %cst_17 : f32 to vector<8x128xf32>
    %41 = arith.subf %40, %37 : vector<8x128xf32>
    %42 = arith.select %39, %41, %37 : vector<8x128xi1>, vector<8x128xf32>
    %cst_18 = arith.constant 1.000000e+00 : f32
    %43 = vector.broadcast %cst_18 : f32 to vector<8x128xf32>
    %44 = arith.addf %43, %42 : vector<8x128xf32>
    %45 = arith.mulf %8, %44 : vector<8x128xf32>
    %46 = arith.truncf %45 : vector<8x128xf32> to vector<8x128xbf16>
    %c0_19 = arith.constant 0 : index
    %c0_20 = arith.constant 0 : index
    %47 = vector.load %arg4[%c0_19, %c0_20] : memref<128x128xbf16, #tpu.memory_space<vmem>>, vector<128x128xbf16>
    %cst_21 = arith.constant dense<0.000000e+00> : vector<8x128xf32>
    %48 = tpu.matmul %46, %47, %cst_21 {dimension_numbers = #tpu.dot_dimension_numbers<[1], [0], [0], [1], [0, 0, 1, 1], [], []>} : vector<8x128xbf16>, vector<128x128xbf16>, vector<8x128xf32> -> vector<8x128xf32>
    %c0_22 = arith.constant 0 : index
    %c0_23 = arith.constant 0 : index
    %49 = vector.load %arg5[%c0_22, %c0_23] : memref<1x128xf32, #tpu.memory_space<vmem>>, vector<1x128xf32>
    %50 = vector.broadcast %49 : vector<1x128xf32> to vector<8x128xf32>
    %51 = arith.addf %48, %50 : vector<8x128xf32>
    %52 = vector.extract_strided_slice %51 {offsets = [0, 0], sizes = [8, 5], strides = [1, 1]} : vector<8x128xf32> to vector<8x5xf32>
    %c0_24 = arith.constant 0 : index
    %c0_25 = arith.constant 0 : index
    %53 = vector.load %arg6[%c0_24, %c0_25] : memref<8x5xf32, #tpu.memory_space<vmem>>, vector<8x5xf32>
    tpu.vector_store %arg6[%c0_24, %c0_25], %52 {strides = array<i32>} : memref<8x5xf32, #tpu.memory_space<vmem>>, vector<8x5xf32>,
    return
  }
  func.func @transform_0(%arg0: i32) -> (i32, i32) {
    %c0_i32 = arith.constant 0 : i32
    %c0_i32_0 = arith.constant 0 : i32
    return %arg0, %c0_i32 : i32, i32
  }
  func.func @transform_1(%arg0: i32) -> (i32, i32) {
    %c0_i32 = arith.constant 0 : i32
    %c0_i32_0 = arith.constant 0 : i32
    %c0_i32_1 = arith.constant 0 : i32
    return %c0_i32, %c0_i32_0 : i32, i32
  }
  func.func @transform_2(%arg0: i32) -> (i32, i32) {
    %c0_i32 = arith.constant 0 : i32
    %c0_i32_0 = arith.constant 0 : i32
    %c0_i32_1 = arith.constant 0 : i32
    return %c0_i32, %c0_i32_0 : i32, i32
  }
  func.func @transform_3(%arg0: i32) -> (i32, i32) {
    %c0_i32 = arith.constant 0 : i32
    %c0_i32_0 = arith.constant 0 : i32
    %c0_i32_1 = arith.constant 0 : i32
    return %c0_i32, %c0_i32_0 : i32, i32
  }
  func.func @transform_4(%arg0: i32) -> (i32, i32) {
    %c0_i32 = arith.constant 0 : i32
    %c0_i32_0 = arith.constant 0 : i32
    %c0_i32_1 = arith.constant 0 : i32
    return %c0_i32, %c0_i32_0 : i32, i32
  }
  func.func @transform_5(%arg0: i32) -> (i32, i32) {
    %c0_i32 = arith.constant 0 : i32
    %c0_i32_0 = arith.constant 0 : i32
    return %arg0, %c0_i32 : i32, i32
  }
}

</mosaic_0001>

<llo_original>
// kernel: forward.1
$region0: #{forward.1}
  #allocation0 [shape = 'u32[]', space=smem, size = 0x4, offset = 0x4, fixed_abs, tag = 'smem constant byte address 0x4 - core index']
  #allocation1 [shape = 'u32[144,128]{1,0:T(1,128)}', space=vmem, size = 0x12000, scoped, tag = 'internal scratch']
  %s0 = inlined_call_operand.hbm [shape: f32[16,32], index: 0, kind: input, shape index: {}]
  %s1 = inlined_call_operand.vmem [shape: bf16[32,128], index: 1, kind: input, shape index: {}]
  %s2 = inlined_call_operand.vmem [shape: f32[1,128], index: 2, kind: input, shape index: {}]
  %s3 = inlined_call_operand.hbm [shape: bf16[128,128], index: 3, kind: input, shape index: {}]
  %s4 = inlined_call_operand.vmem [shape: f32[1,128], index: 4, kind: input, shape index: {}]
  %s5 = inlined_call_operand.vmem [shape: f32[16,5], index: 5, kind: output, shape index: {}]
  %s6 = sld [smem:[#allocation0]]
  $region61: #{forward.1} parent=0
    _
  %s8 = ssub.s32 1, %s6
  %s9 = scalar_select 0, %s8, %s6
  $region1: #{forward.1} parent=0
    #allocation2 [shape = 'u8[8192]{0}', space=vmem, size = 0x2000, scoped, tag = 'input window, operand 0']
    #allocation3 [shape = 's32[2]{0}', space=sflag, size = 0x8, scoped, tag = 'scoped memory for forward.1']
    #allocation4 [shape = 'u8[32768]{0}', space=vmem, size = 0x8000, scoped, tag = 'input window, operand 3, single buffered']
    #allocation5 [shape = 's32[1]{0}', space=sflag, size = 0x4, scoped, tag = 'scoped memory for forward.1']
    %10 = vsyncpa [#allocation3], 0
    %s11 = scalar_lea.sflag [#allocation3], 1
    %12 = vsyncpa %s11, 0
    %13 = vsyncpa [#allocation5], 0
    loop: start=0, step=1, limit=4
    $region2: #{forward.1} parent=1 // loop_pre_header
      _
    $region3: #{forward.1} parent=1 // loop_header
      %s15 = sphi 0, %s19
      %p16 = scmp.ge.s32.totalorder %s15, 4
      %s25 = sphi 0, %s27
      %s28 = sphi 0, %s25
      %s29 = sphi 0, %s28
      %s45 = sphi 0, %s29
      %s49 = sphi 0, %s49
      %s51 = sphi 0, %s49
      %s52 = sphi 0, %s51
      %s66 = sphi 0, %s52
      %s70 = sphi 0, %s70
      %s72 = sphi 0, %s70
      %s73 = sphi 0, %s72
      %s87 = sphi 0, %s73
      %s91 = sphi 0, %s91
      %s93 = sphi 0, %s91
      %s94 = sphi 0, %s93
      %s108 = sphi 0, %s94
      %s112 = sphi 0, %s112
      %s114 = sphi 0, %s112
      %s115 = sphi 0, %s114
      %s129 = sphi 0, %s115
      %s135 = sphi 0, %s137
      %s138 = sphi 0, %s135
      %s139 = sphi 0, %s138
      %s155 = sphi 0, %s139
    $region4: #{forward.1} parent=1 // loop_header_branch
      %18 = sbr.rel (%p16) target = $region8
    $region5: #{forward.1} parent=1 // loop_body
      %s20 = ssub.s32 %s15, 1
      %s21 = ssub.s32 %s15, 2
      %s22 = sadd.s32 %s15, 1
      %s23 = ssub.s32 %s15, %s22
      %p24 = scmp.eq.s32.totalorder %s23, 0
      %s26 = sadd.s32 %s25, 1
      %s27 = scalar_select %p24, %s25, %s26
      %p30 = pneg %p24
      %p31 = scmp.eq.s32.totalorder %s15, 1
      %p32 = por %p30, %p31
      %p33 = scmp.ne.s32.totalorder %s25, %s28
      %p34 = scmp.eq.s32.totalorder %s15, 0
      %p35 = por %p33, %p34
      %p36 = scmp.ne.s32.totalorder %s25, %s28
      %p37 = scmp.eq.s32.totalorder %s20, 1
      %p38 = por %p36, %p37
      %p39 = scmp.ne.s32.totalorder %s28, %s29
      %p40 = scmp.eq.s32.totalorder %s20, 0
      %p41 = por %p39, %p40
      %p42 = scmp.ne.s32.totalorder %s28, %s29
      %p43 = scmp.eq.s32.totalorder %s21, 1
      %p44 = por %p42, %p43
      %p46 = scmp.ne.s32.totalorder %s29, %s45
      %p47 = scmp.eq.s32.totalorder %s21, 0
      %p48 = por %p46, %p47
      %s50 = sadd.s32 %s49, 1
      %p53 = scmp.eq.s32.totalorder %s15, 1
      %p54 = scmp.ne.s32.totalorder %s49, %s51
      %p55 = scmp.eq.s32.totalorder %s15, 0
      %p56 = por %p54, %p55
      %p57 = scmp.ne.s32.totalorder %s49, %s51
      %p58 = scmp.eq.s32.totalorder %s20, 1
      %p59 = por %p57, %p58
      %p60 = scmp.ne.s32.totalorder %s51, %s52
      %p61 = scmp.eq.s32.totalorder %s20, 0
      %p62 = por %p60, %p61
      %p63 = scmp.ne.s32.totalorder %s51, %s52
      %p64 = scmp.eq.s32.totalorder %s21, 1
      %p65 = por %p63, %p64
      %p67 = scmp.ne.s32.totalorder %s52, %s66
      %p68 = scmp.eq.s32.totalorder %s21, 0
      %p69 = por %p67, %p68
      %s71 = sadd.s32 %s70, 1
      %p74 = scmp.eq.s32.totalorder %s15, 1
      %p75 = scmp.ne.s32.totalorder %s70, %s72
      %p76 = scmp.eq.s32.totalorder %s15, 0
      %p77 = por %p75, %p76
      %p78 = scmp.ne.s32.totalorder %s70, %s72
      %p79 = scmp.eq.s32.totalorder %s20, 1
      %p80 = por %p78, %p79
      %p81 = scmp.ne.s32.totalorder %s72, %s73
      %p82 = scmp.eq.s32.totalorder %s20, 0
      %p83 = por %p81, %p82
      %p84 = scmp.ne.s32.totalorder %s72, %s73
      %p85 = scmp.eq.s32.totalorder %s21, 1
      %p86 = por %p84, %p85
      %p88 = scmp.ne.s32.totalorder %s73, %s87
      %p89 = scmp.eq.s32.totalorder %s21, 0
      %p90 = por %p88, %p89
      %s92 = sadd.s32 %s91, 1
      %p95 = scmp.eq.s32.totalorder %s15, 1
      %p96 = scmp.ne.s32.totalorder %s91, %s93
      %p97 = scmp.eq.s32.totalorder %s15, 0
      %p98 = por %p96, %p97
      %p99 = scmp.ne.s32.totalorder %s91, %s93
      %p100 = scmp.eq.s32.totalorder %s20, 1
      %p101 = por %p99, %p100
      %p102 = scmp.ne.s32.totalorder %s93, %s94
      %p103 = scmp.eq.s32.totalorder %s20, 0
      %p104 = por %p102, %p103
      %p105 = scmp.ne.s32.totalorder %s93, %s94
      %p106 = scmp.eq.s32.totalorder %s21, 1
      %p107 = por %p105, %p106
      %p109 = scmp.ne.s32.totalorder %s94, %s108
      %p110 = scmp.eq.s32.totalorder %s21, 0
      %p111 = por %p109, %p110
      %s113 = sadd.s32 %s112, 1
      %p116 = scmp.eq.s32.totalorder %s15, 1
      %p117 = scmp.ne.s32.totalorder %s112, %s114
      %p118 = scmp.eq.s32.totalorder %s15, 0
      %p119 = por %p117, %p118
      %p120 = scmp.ne.s32.totalorder %s112, %s114
      %p121 = scmp.eq.s32.totalorder %s20, 1
      %p122 = por %p120, %p121
      %p123 = scmp.ne.s32.totalorder %s114, %s115
      %p124 = scmp.eq.s32.totalorder %s20, 0
      %p125 = por %p123, %p124
      %p126 = scmp.ne.s32.totalorder %s114, %s115
      %p127 = scmp.eq.s32.totalorder %s21, 1
      %p128 = por %p126, %p127
      %p130 = scmp.ne.s32.totalorder %s115, %s129
      %p131 = scmp.eq.s32.totalorder %s21, 0
      %p132 = por %p130, %p131
      %s133 = ssub.s32 %s15, %s22
      %p134 = scmp.eq.s32.totalorder %s133, 0
      %s136 = sadd.s32 %s135, 1
      %s137 = scalar_select %p134, %s135, %s136
      %p140 = pneg %p134
      %p141 = scmp.eq.s32.totalorder %s15, 1
      %p142 = por %p140, %p141
      %p143 = scmp.ne.s32.totalorder %s135, %s138
      %p144 = scmp.eq.s32.totalorder %s15, 0
      %p145 = por %p143, %p144
      %p146 = scmp.ne.s32.totalorder %s135, %s138
      %p147 = scmp.eq.s32.totalorder %s20, 1
      %p148 = por %p146, %p147
      %p149 = scmp.ne.s32.totalorder %s138, %s139
      %p150 = scmp.eq.s32.totalorder %s20, 0
      %p151 = por %p149, %p150
      %p152 = scmp.ne.s32.totalorder %s138, %s139
      %p153 = scmp.eq.s32.totalorder %s21, 1
      %p154 = por %p152, %p153
      %p156 = scmp.ne.s32.totalorder %s139, %s155
      %p157 = scmp.eq.s32.totalorder %s21, 0
      %p158 = por %p156, %p157
      %p159 = scmp.le.s32.totalorder 1, %s15
      %p160 = scmp.lt.s32.totalorder %s15, 3
      %p161 = pnand %p159, %p160
      %p162 = pneg %p161
      // Predicated region
      $region9: #{forward.1} parent=5 // pred_check
        _
      $region10: #{forward.1} parent=5 // pred_check_branch
        %164 = sbr.rel (%p161) target = $region12
      $region11: #{forward.1} parent=5 // pred_region
        %s165 = ssub.s32 %s15, 1
        // Predicated region
        $region13: #{forward.1} parent=11 // pred_check
          %p166 = pneg %p62
        $region14: #{forward.1} parent=11 // pred_check_branch
          %168 = sbr.rel (%p166) target = $region16
        $region15: #{forward.1} parent=11 // pred_region
          _
        $region16: #{forward.1} parent=11 // pred_fallthru
          _
        // Predicated region
        $region17: #{forward.1} parent=11 // pred_check
          %p169 = pneg %p83
        $region18: #{forward.1} parent=11 // pred_check_branch
          %171 = sbr.rel (%p169) target = $region20
        $region19: #{forward.1} parent=11 // pred_region
          _
        $region20: #{forward.1} parent=11 // pred_fallthru
          _
        // Predicated region
        $region21: #{forward.1} parent=11 // pred_check
          %p172 = pneg %p104
        $region22: #{forward.1} parent=11 // pred_check_branch
          %174 = sbr.rel (%p172) target = $region24
        $region23: #{forward.1} parent=11 // pred_region
          %s176 = ssub.s32 1024, 1024
          %177 = vsyncadd [#allocation5], %s176
          %s178 = sshll.u32 [#allocation4], 4
          %s179 = int_to_ptr.vmem [resolvable:$true] %s178
          %184 = dma.hbm_to_vmem [thread:$0]  %s3, 1024, %s179, [#allocation5], 64, 64, 4
        $region24: #{forward.1} parent=11 // pred_fallthru
          _
        // Predicated region
        $region25: #{forward.1} parent=11 // pred_check
          %p185 = pneg %p125
        $region26: #{forward.1} parent=11 // pred_check_branch
          %187 = sbr.rel (%p185) target = $region28
        $region27: #{forward.1} parent=11 // pred_region
          _
        $region28: #{forward.1} parent=11 // pred_fallthru
          _
      $region12: #{forward.1} parent=5 // pred_fallthru
        _
      %p188 = scmp.lt.s32.totalorder %s15, 2
      // Predicated region
      $region29: #{forward.1} parent=5 // pred_check
        %p189 = pneg %p188
      $region30: #{forward.1} parent=5 // pred_check_branch
        %191 = sbr.rel (%p189) target = $region32
      $region31: #{forward.1} parent=5 // pred_region
        // Predicated region
        $region33: #{forward.1} parent=31 // pred_check
          %p192 = pneg %p35
        $region34: #{forward.1} parent=31 // pred_check_branch
          %194 = sbr.rel (%p192) target = $region36
        $region35: #{forward.1} parent=31 // pred_region
          %s195 = sand.u32 %s25, 1
          %s196 = scalar_lea.sflag [#allocation3], %s195
          %s197 = sand.u32 %s25, 1
          %s198 = smul.addr %s197, 8
          %s199 = scalar_lea.vmem [#allocation2], %s198
          %s201 = ssub.s32 128, 128
          %202 = vsyncadd %s196, %s201
          %s203 = smul.addr %s15, 128
          %s204 = scalar_lea.hbm %s0, %s203
          %s206 = sshll.u32 %s199, 4
          %s207 = int_to_ptr.vmem [resolvable:$true] %s206
          %209 = dma.hbm_to_vmem [thread:$0]  %s204, 128, %s207, %s196
        $region36: #{forward.1} parent=31 // pred_fallthru
          _
      $region32: #{forward.1} parent=5 // pred_fallthru
        _
      %p210 = scmp.le.s32.totalorder 1, %s15
      %p211 = scmp.lt.s32.totalorder %s15, 3
      %p212 = pnand %p210, %p211
      %p213 = pneg %p212
      // Predicated region
      $region37: #{forward.1} parent=5 // pred_check
        _
      $region38: #{forward.1} parent=5 // pred_check_branch
        %215 = sbr.rel (%p212) target = $region40
      $region39: #{forward.1} parent=5 // pred_region
        %s216 = ssub.s32 %s15, 1
        %s217 = sand.u32 %s28, 1
        %s218 = scalar_lea.sflag [#allocation3], %s217
        %s219 = sand.u32 %s28, 1
        %s220 = smul.addr %s219, 8
        %s221 = scalar_lea.vmem [#allocation2], %s220
        // Predicated region
        $region41: #{forward.1} parent=39 // pred_check
          %p222 = pneg %p41
        $region42: #{forward.1} parent=39 // pred_check_branch
          %224 = sbr.rel (%p222) target = $region44
        $region43: #{forward.1} parent=39 // pred_region
          %225 = dma.done %s218, 128
        $region44: #{forward.1} parent=39 // pred_fallthru
          _
        // Predicated region
        $region45: #{forward.1} parent=39 // pred_check
          %p226 = pneg %p104
        $region46: #{forward.1} parent=39 // pred_check_branch
          %228 = sbr.rel (%p226) target = $region48
        $region47: #{forward.1} parent=39 // pred_region
          %229 = dma.done [#allocation5], 1024
        $region48: #{forward.1} parent=39 // pred_fallthru
          _
        %s230 = sand.u32 %s28, 1
        %s231 = scalar_lea.sflag [#allocation3], %s230
        %s232 = sand.u32 %s28, 1
        %s233 = smul.addr %s232, 8
        %s234 = scalar_lea.vmem [#allocation2], %s233
        %p235 = pneg %p41
        %p236 = pneg %p38
        %p237 = pneg %p62
        %p238 = pneg %p59
        %p239 = pneg %p83
        %p240 = pneg %p80
        %p241 = pneg %p104
        %p242 = pneg %p101
        %p243 = pneg %p125
        %p244 = pneg %p122
        %p245 = pneg %p151
        %p246 = pneg %p148
        %p247 = scmp.lt.s32.totalorder %s20, 1
        %s248 = scalar_select %p247, %s20, 1
        %s249 = smul.addr %s248, 8
        %s250 = scalar_lea.vmem %s5, %s249
        %p251 = scmp.lt.s32.totalorder %s20, 1
        %s252 = scalar_select %p251, %s20, 1
        %s253 = smul.addr %s252, 8
        %s254 = scalar_lea.vmem %s5, %s253
        %v256 = vld [vmem:[%s221] sm:$0xff]
        %v257 = vpack.c.bf16 %v256, %v256
        %v258 = vld [vmem:[%s1] sm:$0xf]
        %v259 = vld [vmem:[%s1 + $0x4] sm:$0xf]
        %v260 = vld [vmem:[%s1 + $0x8] sm:$0xf]
        %v261 = vld [vmem:[%s1 + $0xc] sm:$0xf]
        %v262 = vld [vmem:[%s2] sm:$0x1]
        %v264 = vlaneseq
        %v265 = vshrl.u32 %v264, 7
        %v266 = vsub.s32 0, %v265
        %v267 = vrot.slane %v262, %v266
        %v273 = vunpack.c.l.b16 %v258
        %v274 = vunpack.c.l.b16 %v259
        %v275 = vunpack.c.l.b16 %v260
        %v276 = vunpack.c.l.b16 %v261
        %v277 = vpack.c.b16 %v274, %v273
        %v278 = vpack.c.b16 %v276, %v275
        %vm281 = vcmask 261120
        %v283 = vsel %vm281, %v257, 0
        %285 = vmatprep.subr.bf16.mxu0 0
        %286 = vmatpush1.bf16.msra.mxu0 %v277
        %287 = vmatprep.subr.bf16.mxu0 0
        %288 = vmatpush1.bf16.msra.mxu0 %v278
        %289 = vmatprep.subr.bf16.mxu0 0
        %290 = vmatpush1.bf16.msra.mxu0 0
        %291 = vmatprep.subr.bf16.mxu0 0
        %292 = vmatpush1.bf16.msra.mxu0 0
        %293 = vmatprep.subr.bf16.mxu0 0
        %294 = vmatpush1.bf16.msra.mxu0 0
        %295 = vmatprep.subr.bf16.mxu0 0
        %296 = vmatpush1.bf16.msra.mxu0 0
        %297 = vmatprep.subr.bf16.mxu0 0
        %298 = vmatpush1.bf16.msra.mxu0 0
        %299 = vmatprep.subr.bf16.mxu0 0
        %300 = vmatpush1.bf16.msra.mxu0 0
        %301 = vmatprep.subr.bf16.mxu0 0
        %302 = vmatpush1.bf16.msra.mxu0 0
        %303 = vmatprep.subr.bf16.mxu0 0
        %304 = vmatpush1.bf16.msra.mxu0 0
        %305 = vmatprep.subr.bf16.mxu0 0
        %306 = vmatpush1.bf16.msra.mxu0 0
        %307 = vmatprep.subr.bf16.mxu0 0
        %308 = vmatpush1.bf16.msra.mxu0 0
        %309 = vmatprep.subr.bf16.mxu0 0
        %310 = vmatpush1.bf16.msra.mxu0 0
        %311 = vmatprep.subr.bf16.mxu0 0
        %312 = vmatpush1.bf16.msra.mxu0 0
        %313 = vmatprep.subr.bf16.mxu0 0
        %314 = vmatpush1.bf16.msra.mxu0 0
        %315 = vmatprep.subr.bf16.mxu0 0
        %316 = vmatpush1.bf16.msra.mxu0 0
        %317 = vmatprep.mubr.bf16.mxu0 0
        %318 = vmatmul.mubr.bf16.gmra.mrb[0].mxu0 %v283
        %v319 = vpop.f32.mrb[0].mxu0
        %v320 = vadd.f32 %v267, %v319
        %v321 = vpop.f32.mrb[0].mxu0
        %v322 = vpop.f32.mrb[0].mxu0
        %v323 = vpop.f32.mrb[0].mxu0
        %324 = vdwg.mxu0
        %v325 = vmul.f32 %v320, 0.5
        %v326 = vmul.f32 %v320, 0.70710677
        %v327 = vand.u32 2147483647, %v326
        %v328 = vmul.f32 %v327, 0.3275911
        %v329 = vadd.f32 %v328, 1.0
        %v330 = vrcp.pop %v329
        %v331 = vmul.f32 %v330, 1.0614054
        %v332 = vadd.f32 %v331, -1.4531521
        %v333 = vmul.f32 %v332, %v330
        %v334 = vadd.f32 %v333, 1.4214138
        %v335 = vmul.f32 %v334, %v330
        %v336 = vadd.f32 %v335, -0.28449672
        %v337 = vmul.f32 %v336, %v330
        %v338 = vadd.f32 %v337, 0.2548296
        %v339 = vmul.f32 %v338, %v330
        %v340 = vsub.f32 0.0, %v327
        %v341 = vmul.f32 %v340, %v327
        %v342 = vmul.f32 %v341, 1.442695
        %v343 = vpow.pop %v342
        %v344 = vmul.f32 %v339, %v343
        %v345 = vsub.f32 1.0, %v344
        %vm346 = vcmp.lt.f32.partialorder %v326, 0.0
        %v347 = vsub.f32 0.0, %v345
        %v348 = vsel %vm346, %v347, %v345
        %v349 = vadd.f32 %v348, 1.0
        %v350 = vmul.f32 %v325, %v349
        %v351 = vpack.c.bf16 %v350, %v350
        %v352 = vld [vmem:[#allocation4] sm:$0xf]
        %v353 = vld [vmem:[#allocation4 + $0x4] sm:$0xf]
        %v354 = vld [vmem:[#allocation4 + $0x8] sm:$0xf]
        %v355 = vld [vmem:[#allocation4 + $0xc] sm:$0xf]
        %v356 = vld [vmem:[#allocation4 + $0x10] sm:$0xf]
        %v357 = vld [vmem:[#allocation4 + $0x14] sm:$0xf]
        %v358 = vld [vmem:[#allocation4 + $0x18] sm:$0xf]
        %v359 = vld [vmem:[#allocation4 + $0x1c] sm:$0xf]
        %v360 = vld [vmem:[#allocation4 + $0x20] sm:$0xf]
        %v361 = vld [vmem:[#allocation4 + $0x24] sm:$0xf]
        %v362 = vld [vmem:[#allocation4 + $0x28] sm:$0xf]
        %v363 = vld [vmem:[#allocation4 + $0x2c] sm:$0xf]
        %v364 = vld [vmem:[#allocation4 + $0x30] sm:$0xf]
        %v365 = vld [vmem:[#allocation4 + $0x34] sm:$0xf]
        %v366 = vld [vmem:[#allocation4 + $0x38] sm:$0xf]
        %v367 = vld [vmem:[#allocation4 + $0x3c] sm:$0xf]
        %v368 = vld [vmem:[%s4] sm:$0x1]
        %v370 = vlaneseq
        %v371 = vshrl.u32 %v370, 7
        %v372 = vsub.s32 0, %v371
        %v373 = vrot.slane %v368, %v372
        %v391 = vunpack.c.l.b16 %v352
        %v392 = vunpack.c.l.b16 %v353
        %v393 = vunpack.c.l.b16 %v354
        %v394 = vunpack.c.l.b16 %v355
        %v395 = vunpack.c.l.b16 %v356
        %v396 = vunpack.c.l.b16 %v357
        %v397 = vunpack.c.l.b16 %v358
        %v398 = vunpack.c.l.b16 %v359
        %v399 = vunpack.c.l.b16 %v360
        %v400 = vunpack.c.l.b16 %v361
        %v401 = vunpack.c.l.b16 %v362
        %v402 = vunpack.c.l.b16 %v363
        %v403 = vunpack.c.l.b16 %v364
        %v404 = vunpack.c.l.b16 %v365
        %v405 = vunpack.c.l.b16 %v366
        %v406 = vunpack.c.l.b16 %v367
        %v407 = vpack.c.b16 %v392, %v391
        %v408 = vpack.c.b16 %v394, %v393
        %v409 = vpack.c.b16 %v396, %v395
        %v410 = vpack.c.b16 %v398, %v397
        %v411 = vpack.c.b16 %v400, %v399
        %v412 = vpack.c.b16 %v402, %v401
        %v413 = vpack.c.b16 %v404, %v403
        %v414 = vpack.c.b16 %v406, %v405
        %423 = vmatprep.subr.bf16.mxu0 0
        %424 = vmatpush1.bf16.msra.mxu0 %v407
        %425 = vmatprep.subr.bf16.mxu0 0
        %426 = vmatpush1.bf16.msra.mxu0 %v408
        %427 = vmatprep.subr.bf16.mxu0 0
        %428 = vmatpush1.bf16.msra.mxu0 %v409
        %429 = vmatprep.subr.bf16.mxu0 0
        %430 = vmatpush1.bf16.msra.mxu0 %v410
        %431 = vmatprep.subr.bf16.mxu0 0
        %432 = vmatpush1.bf16.msra.mxu0 %v411
        %433 = vmatprep.subr.bf16.mxu0 0
        %434 = vmatpush1.bf16.msra.mxu0 %v412
        %435 = vmatprep.subr.bf16.mxu0 0
        %436 = vmatpush1.bf16.msra.mxu0 %v413
        %437 = vmatprep.subr.bf16.mxu0 0
        %438 = vmatpush1.bf16.msra.mxu0 %v414
        %439 = vmatprep.subr.bf16.mxu0 0
        %440 = vmatpush1.bf16.msra.mxu0 0
        %441 = vmatprep.subr.bf16.mxu0 0
        %442 = vmatpush1.bf16.msra.mxu0 0
        %443 = vmatprep.subr.bf16.mxu0 0
        %444 = vmatpush1.bf16.msra.mxu0 0
        %445 = vmatprep.subr.bf16.mxu0 0
        %446 = vmatpush1.bf16.msra.mxu0 0
        %447 = vmatprep.subr.bf16.mxu0 0
        %448 = vmatpush1.bf16.msra.mxu0 0
        %449 = vmatprep.subr.bf16.mxu0 0
        %450 = vmatpush1.bf16.msra.mxu0 0
        %451 = vmatprep.subr.bf16.mxu0 0
        %452 = vmatpush1.bf16.msra.mxu0 0
        %453 = vmatprep.subr.bf16.mxu0 0
        %454 = vmatpush1.bf16.msra.mxu0 0
        %455 = vmatprep.mubr.bf16.mxu0 0
        %456 = vmatmul.mubr.bf16.gmra.mrb[0].mxu0 %v351
        %v457 = vpop.f32.mrb[0].mxu0
        %v458 = vadd.f32 %v373, %v457
        %v459 = vpop.f32.mrb[0].mxu0
        %v460 = vpop.f32.mrb[0].mxu0
        %v461 = vpop.f32.mrb[0].mxu0
        %462 = vdwg.mxu0
        %vm463 = vcmask 39936
        %464 = vst.msk [vmem:[%s254] sm:$0xff] %vm463, %v458
        %p465 = scmp.lt.s32.totalorder %s20, 1
        %s466 = scalar_select %p465, %s20, 1
        %s467 = smul.addr %s466, 8
        %s468 = scalar_lea.vmem %s5, %s467
        // Predicated region
        $region49: #{forward.1} parent=39 // pred_check
          %p469 = pneg %p148
        $region50: #{forward.1} parent=39 // pred_check_branch
          %471 = sbr.rel (%p469) target = $region52
        $region51: #{forward.1} parent=39 // pred_region
          _
        $region52: #{forward.1} parent=39 // pred_fallthru
          _
      $region40: #{forward.1} parent=5 // pred_fallthru
        _
      %p472 = scmp.le.s32.totalorder 2, %s15
      // Predicated region
      $region53: #{forward.1} parent=5 // pred_check
        %p473 = pneg %p472
      $region54: #{forward.1} parent=5 // pred_check_branch
        %475 = sbr.rel (%p473) target = $region56
      $region55: #{forward.1} parent=5 // pred_region
        %s476 = ssub.s32 %s15, 2
        // Predicated region
        $region57: #{forward.1} parent=55 // pred_check
          %p477 = pneg %p154
        $region58: #{forward.1} parent=55 // pred_check_branch
          %479 = sbr.rel (%p477) target = $region60
        $region59: #{forward.1} parent=55 // pred_region
          %p480 = scmp.lt.s32.totalorder %s21, 1
          %s481 = scalar_select %p480, %s21, 1
          %s482 = smul.addr %s481, 8
          %s483 = scalar_lea.vmem %s5, %s482
        $region60: #{forward.1} parent=55 // pred_fallthru
          _
      $region56: #{forward.1} parent=5 // pred_fallthru
        _
    $region6: #{forward.1} parent=1 // loop_footer
      %s19 = sadd.s32 1, %s15
    $region7: #{forward.1} parent=1 // loop_footer_branch
      %14 = sbr.rel target = $region3
    $region8: #{forward.1} parent=1 // loop_exit
      _
    %484 = vsyncpa [#allocation3], 1
    %s485 = scalar_lea.sflag [#allocation3], 1
    %486 = vsyncpa %s485, 1
    %487 = vsyncpa [#allocation5], 1

</llo_original>
